<compile_context>
chip_gen: v7x
topology: tpu7x:2x2x1
jax: 0.10.0
libtpu: 0.0.40
codegen_flags: <defaults>
</compile_context>

<pallas_src>
import math

import jax
import jax.numpy as jnp
from jax.experimental import pallas as pl
from jax.experimental.pallas import tpu as pltpu

_LANE = 128
_MIB = 1024 * 1024


def _cdiv(a, b):
    return -(-a // b)


def _spatial_dropout_kernel(x_ref, mask_ref, o_ref):
    # x_ref:    (1, TILE_ROWS, TILE_LANES) VMEM tile (one batch element)
    # mask_ref: (1, 1, TILE_LANES) pre-scaled keep-mask (0 or 1/(1-p)), float32.
    #           Only re-fetched when the batch / lane-tile index changes.
    # o_ref:    (1, TILE_ROWS, TILE_LANES)
    o_ref[...] = (x_ref[...] * mask_ref[...]).astype(o_ref.dtype)


def spatial_dropout_1d(
    x,
    p,
    key,
    training=True,
    *,
    target_block_bytes=4 * _MIB,   # ~4 MiB tiles: <10% per-step overhead on v7x,
                                   # ~16-18 MiB live (double-buffered in+out+mask).
    min_pallas_bytes=1 * _MIB,     # below this, a fused XLA multiply is already at
                                   # roofline -> skip pallas_call fixed overhead.
    donate_x=False,                # alias x to the output (only if caller never
                                   # reuses x after this op).
):
    """JAX/Pallas equivalent of spatialDropout1D(p).forward(x), x of shape (B, T, C)."""
    # TODO(synk): `training` / `p` must be Python scalars here; traced values would
    # silently bypass these early-outs under jit.
    if (not training) or p == 0.0:
        return x  # eval mode / p == 0: identity (matches nn.Dropout2d)

    B, T, C = x.shape
    scale = 1.0 / (1.0 - p)

    # One Bernoulli(keep) draw per (batch, channel) — the same channel mask for every
    # timestep, exactly what Dropout2d does on the permuted (B, C, T) tensor. Keep the
    # folded 1/(1-p) scale in float32 (no bf16 quantization); the kernel casts back.
    # TODO(synk): RNG is JAX threefry, not bitwise-reproducible vs. torch's RNG.
    keep = jax.random.bernoulli(key, 1.0 - p, shape=(B, 1, C))
    mask = jnp.where(keep, jnp.float32(scale), jnp.float32(0.0))

    itemsize = jnp.dtype(x.dtype).itemsize
    if x.size * itemsize < min_pallas_bytes:
        # Tiny tensors: pure-JAX fallback (identical semantics).
        return (x * mask).astype(x.dtype)

    # ---- Lane-dense layout plumbing (biggest single lever: full-lane stores) ----
    # Fold (time, channel) into a lane axis of width L2 = lcm(C, 128) when possible,
    # so the output's last dim is a multiple of 128 (unmasked vst).
    L2 = (C * _LANE) // math.gcd(C, _LANE)  # lcm(C, 128)
    if C % _LANE != 0 and (T * C) % L2 == 0 and L2 * itemsize <= target_block_bytes:
        reps = L2 // C
        x2 = x.reshape(B, (T * C) // L2, L2)
        mask2 = jnp.tile(mask, (1, 1, reps))  # lane l maps to channel l % C
    else:
        x2 = x
        mask2 = mask

    _, R, L = x2.shape  # rows to stream per batch element, lane width

    # Sublane multiple for this dtype (8 f32 / 16 bf16 / 32 int8).
    sub = max(8, 32 // itemsize)

    # ---- Lane tiling: bound block bytes even for very wide L (VMEM OOM guard) ----
    if L * itemsize * sub > target_block_bytes and L > _LANE:
        tile_lanes = max(_LANE,
                         (target_block_bytes // (itemsize * sub)) // _LANE * _LANE)
        tile_lanes = min(tile_lanes, (L // _LANE) * _LANE)
    else:
        tile_lanes = L  # full extent (always a legal block shape)

    # ---- Row tiling: sublane-aligned, sized to ~target_block_bytes ----
    bytes_per_row = tile_lanes * itemsize
    tile_rows = max(sub, (target_block_bytes // bytes_per_row) // sub * sub)
    if tile_rows >= R:
        tile_rows = R  # full extent

    n_lane_tiles = _cdiv(L, tile_lanes)

    # ---- Ensure enough grid steps (DMA/compute overlap; feed both v7x TCs) ----
    MIN_STEPS = 8
    if B * _cdiv(R, tile_rows) * n_lane_tiles < MIN_STEPS and R > sub:
        want_row_tiles = max(1, _cdiv(MIN_STEPS, B * n_lane_tiles))
        tr = _cdiv(_cdiv(R, want_row_tiles), sub) * sub  # ceil to sublane multiple
        tile_rows = min(tile_rows, max(sub, tr))
        if tile_rows >= R:
            tile_rows = R

    n_row_tiles = _cdiv(R, tile_rows)
    grid = (B, n_row_tiles, n_lane_tiles)

    # Live VMEM ~= 2x in-tile + 2x out-tile + mask block; set an explicit limit so
    # larger-than-default tiles clear the 16 MiB (v5e) / 32 MiB (v6e,v7x) scoped
    # defaults while staying under v7x's 64 MiB physical VMEM.
    tile_bytes = tile_rows * tile_lanes * itemsize
    vmem_limit = int(min(48 * _MIB, max(32 * _MIB, 5 * tile_bytes + 2 * _MIB)))

    cost = pl.CostEstimate(
        flops=B * R * L,
        transcendentals=0,
        bytes_accessed=2 * B * R * L * itemsize + mask2.size * 4,
    )

    out2 = pl.pallas_call(
        _spatial_dropout_kernel,
        out_shape=jax.ShapeDtypeStruct((B, R, L), x.dtype),
        grid=grid,
        in_specs=[
            # One (batch, row-tile, lane-tile) block of x per step.
            pl.BlockSpec((1, tile_rows, tile_lanes), lambda b, r, l: (b, r, l)),
            # Small mask block, re-DMA'd only when b or the lane tile changes.
            pl.BlockSpec((1, 1, tile_lanes), lambda b, r, l: (b, 0, l)),
        ],
        out_specs=pl.BlockSpec((1, tile_rows, tile_lanes), lambda b, r, l: (b, r, l)),
        compiler_params=pltpu.CompilerParams(
            # All axes independent -> shardable across v7x's 2 TensorCores.
            dimension_semantics=("parallel", "parallel", "parallel"),
            vmem_limit_bytes=vmem_limit,
        ),
        cost_estimate=cost,
        input_output_aliases=({0: 0} if donate_x else {}),
    )(x2, mask2)

    return out2.reshape(B, T, C)


def _reference(x, p, key):
    keep = jax.random.bernoulli(key, 1.0 - p, shape=(x.shape[0], 1, x.shape[2]))
    return (x * jnp.where(keep, jnp.float32(1.0 / (1.0 - p)), jnp.float32(0.0))
            ).astype(x.dtype), keep


if __name__ == "__main__":
    key = jax.random.PRNGKey(0)
    k_x, k_drop, k_x2, k_drop2 = jax.random.split(key, 4)
    p = 0.5

    # --- Case 1: C divides 128 (lane-dense reshape to exactly 128 lanes) ---
    B, T, C = 2, 16, 32
    x = jax.random.normal(k_x, (B, T, C), dtype=jnp.float32)
    out = spatial_dropout_1d(x, p, k_drop, training=True, min_pallas_bytes=0)
    out = jax.block_until_ready(out)
    ref, keep = _reference(x, p, k_drop)
    assert out.shape == x.shape and out.dtype == x.dtype
    assert jnp.allclose(out, ref, atol=1e-6, rtol=1e-6)
    # Dropped channels are zero for every timestep; kept ones scaled by 1/(1-p).
    assert bool(jnp.all(jnp.where(~keep, out == 0.0, True)))

    # --- Case 2: C does not divide 128 -> lcm(C,128) lane-dense path (C=96) ---
    Bb, Tb, Cb = 2, 16, 96
    xb = jax.random.normal(k_x2, (Bb, Tb, Cb), dtype=jnp.float32)
    outb = spatial_dropout_1d(xb, p, k_drop2, training=True, min_pallas_bytes=0)
    outb = jax.block_until_ready(outb)
    refb, keepb = _reference(xb, p, k_drop2)
    assert jnp.allclose(outb, refb, atol=1e-6, rtol=1e-6)
    assert bool(jnp.all(jnp.where(~keepb, outb == 0.0, True)))

    # --- Case 3: tiny-tensor pure-JAX fallback path matches too ---
    out_fb = spatial_dropout_1d(x, p, k_drop, training=True)  # default min_pallas_bytes
    assert jnp.allclose(jax.block_until_ready(out_fb), ref, atol=1e-6, rtol=1e-6)

    # --- Eval mode / p = 0 are identity ---
    assert jnp.array_equal(spatial_dropout_1d(x, p, k_drop, training=False), x)
    assert jnp.array_equal(spatial_dropout_1d(x, 0.0, k_drop, training=True), x)

    print("KERNEL_OK")
</pallas_src>

<mosaic_0001>
module attributes {stable_mosaic.version = 11 : i64} {
  func.func @_spatial_dropout_kernel(%arg0: i32, %arg1: i32, %arg2: i32, %arg3: memref<1x4x128xf32, #tpu.memory_space<vmem>>, %arg4: memref<1x1x128xf32, #tpu.memory_space<vmem>>, %arg5: memref<1x4x128xf32, #tpu.memory_space<vmem>>) attributes {dimension_semantics = [#tpu.dimension_semantics<parallel>, #tpu.dimension_semantics<parallel>, #tpu.dimension_semantics<parallel>], iteration_bounds = array<i64: 2, 1, 1>, scalar_prefetch = 0 : i64, scratch_operands = 0 : i64, tpu.core_type = #tpu.core_type<tc>, window_params = [{transform_indices = @transform_0, window_bounds = array<i64: 1, 4, 128>}, {transform_indices = @transform_1, window_bounds = array<i64: 1, 1, 128>}, {transform_indices = @transform_2, window_bounds = array<i64: 1, 4, 128>}]} {
    %c0 = arith.constant 0 : index
    %c0_0 = arith.constant 0 : index
    %c0_1 = arith.constant 0 : index
    %0 = vector.load %arg3[%c0, %c0_0, %c0_1] : memref<1x4x128xf32, #tpu.memory_space<vmem>>, vector<1x4x128xf32>
    %c0_2 = arith.constant 0 : index
    %c0_3 = arith.constant 0 : index
    %c0_4 = arith.constant 0 : index
    %1 = vector.load %arg4[%c0_2, %c0_3, %c0_4] : memref<1x1x128xf32, #tpu.memory_space<vmem>>, vector<1x1x128xf32>
    %2 = vector.broadcast %1 : vector<1x1x128xf32> to vector<1x4x128xf32>
    %3 = arith.mulf %0, %2 : vector<1x4x128xf32>
    %c0_5 = arith.constant 0 : index
    %c0_6 = arith.constant 0 : index
    %c0_7 = arith.constant 0 : index
    %4 = vector.load %arg5[%c0_5, %c0_6, %c0_7] : memref<1x4x128xf32, #tpu.memory_space<vmem>>, vector<1x4x128xf32>
    tpu.vector_store %arg5[%c0_5, %c0_6, %c0_7], %3 {strides = array<i32>} : memref<1x4x128xf32, #tpu.memory_space<vmem>>, vector<1x4x128xf32>,
    return
  }
  func.func @transform_0(%arg0: i32, %arg1: i32, %arg2: i32) -> (i32, i32, i32) {
    %c0_i32 = arith.constant 0 : i32
    return %arg0, %arg1, %arg2 : i32, i32, i32
  }
  func.func @transform_1(%arg0: i32, %arg1: i32, %arg2: i32) -> (i32, i32, i32) {
    %c0_i32 = arith.constant 0 : i32
    %c0_i32_0 = arith.constant 0 : i32
    return %arg0, %c0_i32, %arg2 : i32, i32, i32
  }
  func.func @transform_2(%arg0: i32, %arg1: i32, %arg2: i32) -> (i32, i32, i32) {
    %c0_i32 = arith.constant 0 : i32
    return %arg0, %arg1, %arg2 : i32, i32, i32
  }
}

</mosaic_0001>

<llo_original>
// kernel: tpu_custom_call.1
$region0: #{tpu_custom_call.1}
  #allocation0 [shape = 'u32[]', space=smem, size = 0x4, offset = 0x4, fixed_abs, tag = 'smem constant byte address 0x4 - core index']
  #allocation1 [shape = 'u32[144,128]{1,0:T(1,128)}', space=vmem, size = 0x12000, scoped, tag = 'internal scratch']
  %s0 = inlined_call_operand.hbm [shape: f32[2,4,128], index: 0, kind: input, shape index: {}]
  %s1 = inlined_call_operand.vmem [shape: f32[2,1,128], index: 1, kind: input, shape index: {}]
  %s2 = inlined_call_operand.hbm [shape: f32[2,4,128], index: 2, kind: output, shape index: {}]
  %s3 = sld [smem:[#allocation0]]
  $region45: #{tpu_custom_call.1} parent=0
    _
  %s5 = ssub.s32 1, %s3
  %s6 = scalar_select 0, %s5, %s3
  $region1: #{tpu_custom_call.1} parent=0
    #allocation2 [shape = 'u8[4096]{0}', space=vmem, size = 0x1000, scoped, tag = 'input window, operand 0']
    #allocation3 [shape = 's32[2]{0}', space=sflag, size = 0x8, scoped, tag = 'scoped memory for tpu_custom_call.1']
    #allocation4 [shape = 's32[2]{0}', space=sflag, size = 0x8, scoped, tag = 'scoped memory for tpu_custom_call.1']
    #allocation5 [shape = 'u8[4096]{0}', space=vmem, size = 0x1000, scoped, tag = 'output window, operand 0']
    %7 = vsyncpa [#allocation3], 0
    %s8 = scalar_lea.sflag [#allocation3], 1
    %9 = vsyncpa %s8, 0
    %10 = vsyncpa [#allocation4], 0
    %s11 = scalar_lea.sflag [#allocation4], 1
    %12 = vsyncpa %s11, 0
    loop: start=0, step=1, limit=4
    $region2: #{tpu_custom_call.1} parent=1 // loop_pre_header
      _
    $region3: #{tpu_custom_call.1} parent=1 // loop_header
      %s14 = sphi 0, %s18
      %p15 = scmp.ge.s32.totalorder %s14, 4
      %s21 = sphi 0, %s40
      %s22 = sphi 0, %s36
      %s23 = sphi 0, %s32
      %s24 = sphi 0, %s21
      %s25 = sphi 0, %s22
      %s26 = sphi 0, %s23
      %s27 = sphi 0, %s24
      %s28 = sphi 0, %s25
      %s29 = sphi 0, %s26
      %s47 = sphi 0, %s49
      %s50 = sphi 0, %s47
      %s51 = sphi 0, %s50
      %s67 = sphi 0, %s51
      %s75 = sphi 0, %s77
      %s78 = sphi 0, %s75
      %s79 = sphi 0, %s78
      %s95 = sphi 0, %s79
      %s105 = sphi 0, %s107
      %s108 = sphi 0, %s105
      %s109 = sphi 0, %s108
      %s125 = sphi 0, %s109
    $region4: #{tpu_custom_call.1} parent=1 // loop_header_branch
      %17 = sbr.rel (%p15) target = $region8
    $region5: #{tpu_custom_call.1} parent=1 // loop_body
      %s19 = ssub.s32 %s14, 1
      %s20 = ssub.s32 %s14, 2
      %s30 = sadd.s32 1, %s23
      %p31 = scmp.ge.s32.totalorder %s30, 1
      %s32 = scalar_select %p31, 0, %s30
      %s33 = sadd.s32 1, %s22
      %s34 = scalar_select %p31, %s33, %s22
      %p35 = scmp.ge.s32.totalorder %s34, 1
      %s36 = scalar_select %p35, 0, %s34
      %s37 = sadd.s32 1, %s21
      %s38 = scalar_select %p35, %s37, %s21
      %p39 = scmp.ge.s32.totalorder %s38, 2
      %s40 = scalar_select %p39, 0, %s38
      %s41 = ssub.s32 %s21, %s40
      %s42 = ssub.s32 %s22, %s36
      %s43 = sor.u32 %s41, %s42
      %s44 = ssub.s32 %s23, %s32
      %s45 = sor.u32 %s43, %s44
      %p46 = scmp.eq.s32.totalorder %s45, 0
      %s48 = sadd.s32 %s47, 1
      %s49 = scalar_select %p46, %s47, %s48
      %p52 = pneg %p46
      %p53 = scmp.eq.s32.totalorder %s14, 1
      %p54 = por %p52, %p53
      %p55 = scmp.ne.s32.totalorder %s47, %s50
      %p56 = scmp.eq.s32.totalorder %s14, 0
      %p57 = por %p55, %p56
      %p58 = scmp.ne.s32.totalorder %s47, %s50
      %p59 = scmp.eq.s32.totalorder %s19, 1
      %p60 = por %p58, %p59
      %p61 = scmp.ne.s32.totalorder %s50, %s51
      %p62 = scmp.eq.s32.totalorder %s19, 0
      %p63 = por %p61, %p62
      %p64 = scmp.ne.s32.totalorder %s50, %s51
      %p65 = scmp.eq.s32.totalorder %s20, 1
      %p66 = por %p64, %p65
      %p68 = scmp.ne.s32.totalorder %s51, %s67
      %p69 = scmp.eq.s32.totalorder %s20, 0
      %p70 = por %p68, %p69
      %s71 = ssub.s32 %s21, %s40
      %s72 = ssub.s32 %s23, %s32
      %s73 = sor.u32 %s71, %s72
      %p74 = scmp.eq.s32.totalorder %s73, 0
      %s76 = sadd.s32 %s75, 1
      %s77 = scalar_select %p74, %s75, %s76
      %p80 = pneg %p74
      %p81 = scmp.eq.s32.totalorder %s14, 1
      %p82 = por %p80, %p81
      %p83 = scmp.ne.s32.totalorder %s75, %s78
      %p84 = scmp.eq.s32.totalorder %s14, 0
      %p85 = por %p83, %p84
      %p86 = scmp.ne.s32.totalorder %s75, %s78
      %p87 = scmp.eq.s32.totalorder %s19, 1
      %p88 = por %p86, %p87
      %p89 = scmp.ne.s32.totalorder %s78, %s79
      %p90 = scmp.eq.s32.totalorder %s19, 0
      %p91 = por %p89, %p90
      %p92 = scmp.ne.s32.totalorder %s78, %s79
      %p93 = scmp.eq.s32.totalorder %s20, 1
      %p94 = por %p92, %p93
      %p96 = scmp.ne.s32.totalorder %s79, %s95
      %p97 = scmp.eq.s32.totalorder %s20, 0
      %p98 = por %p96, %p97
      %s99 = ssub.s32 %s21, %s40
      %s100 = ssub.s32 %s22, %s36
      %s101 = sor.u32 %s99, %s100
      %s102 = ssub.s32 %s23, %s32
      %s103 = sor.u32 %s101, %s102
      %p104 = scmp.eq.s32.totalorder %s103, 0
      %s106 = sadd.s32 %s105, 1
      %s107 = scalar_select %p104, %s105, %s106
      %p110 = pneg %p104
      %p111 = scmp.eq.s32.totalorder %s14, 1
      %p112 = por %p110, %p111
      %p113 = scmp.ne.s32.totalorder %s105, %s108
      %p114 = scmp.eq.s32.totalorder %s14, 0
      %p115 = por %p113, %p114
      %p116 = scmp.ne.s32.totalorder %s105, %s108
      %p117 = scmp.eq.s32.totalorder %s19, 1
      %p118 = por %p116, %p117
      %p119 = scmp.ne.s32.totalorder %s108, %s109
      %p120 = scmp.eq.s32.totalorder %s19, 0
      %p121 = por %p119, %p120
      %p122 = scmp.ne.s32.totalorder %s108, %s109
      %p123 = scmp.eq.s32.totalorder %s20, 1
      %p124 = por %p122, %p123
      %p126 = scmp.ne.s32.totalorder %s109, %s125
      %p127 = scmp.eq.s32.totalorder %s20, 0
      %p128 = por %p126, %p127
      %p129 = scmp.le.s32.totalorder 1, %s14
      %p130 = scmp.lt.s32.totalorder %s14, 3
      %p131 = pnand %p129, %p130
      %p132 = pneg %p131
      // Predicated region
      $region9: #{tpu_custom_call.1} parent=5 // pred_check
        _
      $region10: #{tpu_custom_call.1} parent=5 // pred_check_branch
        %134 = sbr.rel (%p131) target = $region12
      $region11: #{tpu_custom_call.1} parent=5 // pred_region
        %s135 = ssub.s32 %s14, 1
      $region12: #{tpu_custom_call.1} parent=5 // pred_fallthru
        _
      %p136 = scmp.lt.s32.totalorder %s14, 2
      // Predicated region
      $region13: #{tpu_custom_call.1} parent=5 // pred_check
        %p137 = pneg %p136
      $region14: #{tpu_custom_call.1} parent=5 // pred_check_branch
        %139 = sbr.rel (%p137) target = $region16
      $region15: #{tpu_custom_call.1} parent=5 // pred_region
        // Predicated region
        $region17: #{tpu_custom_call.1} parent=15 // pred_check
          %p140 = pneg %p57
        $region18: #{tpu_custom_call.1} parent=15 // pred_check_branch
          %142 = sbr.rel (%p140) target = $region20
        $region19: #{tpu_custom_call.1} parent=15 // pred_region
          %s143 = sand.u32 %s47, 1
          %s144 = scalar_lea.sflag [#allocation3], %s143
          %s145 = sand.u32 %s47, 1
          %s146 = smul.addr %s145, 4
          %s147 = scalar_lea.vmem [#allocation2], %s146
          %s149 = ssub.s32 64, 64
          %150 = vsyncadd %s144, %s149
          %s151 = sadd.s32 %s23, %s22
          %s152 = sadd.s32 %s151, %s21
          %s153 = smul.addr %s152, 64
          %s154 = scalar_lea.hbm %s0, %s153
          %s156 = sshll.u32 %s147, 4
          %s157 = int_to_ptr.vmem [resolvable:$true] %s156
          %159 = dma.hbm_to_vmem [thread:$0]  %s154, 64, %s157, %s144
        $region20: #{tpu_custom_call.1} parent=15 // pred_fallthru
          _
        // Predicated region
        $region21: #{tpu_custom_call.1} parent=15 // pred_check
          %p160 = pneg %p85
        $region22: #{tpu_custom_call.1} parent=15 // pred_check_branch
          %162 = sbr.rel (%p160) target = $region24
        $region23: #{tpu_custom_call.1} parent=15 // pred_region
          %p163 = scmp.lt.s32.totalorder %s21, 1
          %s164 = scalar_select %p163, %s21, 1
          %p165 = scmp.lt.s32.totalorder %s23, 0
          %s166 = scalar_select %p165, %s23, 0
          %s167 = sadd.s32 %s166, %s164
          %s168 = scalar_lea.vmem %s1, %s167
        $region24: #{tpu_custom_call.1} parent=15 // pred_fallthru
          _
      $region16: #{tpu_custom_call.1} parent=5 // pred_fallthru
        _
      %p169 = scmp.le.s32.totalorder 1, %s14
      %p170 = scmp.lt.s32.totalorder %s14, 3
      %p171 = pnand %p169, %p170
      %p172 = pneg %p171
      // Predicated region
      $region25: #{tpu_custom_call.1} parent=5 // pred_check
        _
      $region26: #{tpu_custom_call.1} parent=5 // pred_check_branch
        %174 = sbr.rel (%p171) target = $region28
      $region27: #{tpu_custom_call.1} parent=5 // pred_region
        %s175 = ssub.s32 %s14, 1
        %s176 = sand.u32 %s50, 1
        %s177 = scalar_lea.sflag [#allocation3], %s176
        %s178 = sand.u32 %s50, 1
        %s179 = smul.addr %s178, 4
        %s180 = scalar_lea.vmem [#allocation2], %s179
        // Predicated region
        $region29: #{tpu_custom_call.1} parent=27 // pred_check
          %p181 = pneg %p63
        $region30: #{tpu_custom_call.1} parent=27 // pred_check_branch
          %183 = sbr.rel (%p181) target = $region32
        $region31: #{tpu_custom_call.1} parent=27 // pred_region
          %184 = dma.done %s177, 64
        $region32: #{tpu_custom_call.1} parent=27 // pred_fallthru
          _
        %s185 = sand.u32 %s50, 1
        %s186 = scalar_lea.sflag [#allocation3], %s185
        %s187 = sand.u32 %s50, 1
        %s188 = smul.addr %s187, 4
        %s189 = scalar_lea.vmem [#allocation2], %s188
        %p190 = pneg %p63
        %p191 = pneg %p60
        %p192 = scmp.lt.s32.totalorder %s24, 1
        %s193 = scalar_select %p192, %s24, 1
        %p194 = scmp.lt.s32.totalorder %s26, 0
        %s195 = scalar_select %p194, %s26, 0
        %s196 = sadd.s32 %s195, %s193
        %s197 = scalar_lea.vmem %s1, %s196
        %p198 = pneg %p91
        %p199 = pneg %p88
        %p200 = pneg %p121
        %p201 = pneg %p118
        %s202 = sand.u32 %s108, 1
        %s203 = scalar_lea.sflag [#allocation4], %s202
        %s204 = sand.u32 %s108, 1
        %s205 = smul.addr %s204, 4
        %s206 = scalar_lea.vmem [#allocation5], %s205
        %p207 = scmp.lt.s32.totalorder %s24, 1
        %s208 = scalar_select %p207, %s24, 1
        %p209 = scmp.lt.s32.totalorder %s26, 0
        %s210 = scalar_select %p209, %s26, 0
        %s211 = sadd.s32 %s210, %s208
        %s212 = scalar_lea.vmem %s1, %s211
        %v213 = vld [vmem:[%s180] sm:$0xf]
        %v214 = vld [vmem:[%s212] sm:$0x1]
        %v216 = vlaneseq
        %v217 = vshrl.u32 %v216, 7
        %v218 = vsub.s32 0, %v217
        %v219 = vrot.slane %v214, %v218
        %v221 = vmul.f32 %v213, %v219
        %222 = vst [vmem:[%s206] sm:$0xf] %v221
        %s223 = sand.u32 %s108, 1
        %s224 = scalar_lea.sflag [#allocation4], %s223
        %s225 = sand.u32 %s108, 1
        %s226 = smul.addr %s225, 4
        %s227 = scalar_lea.vmem [#allocation5], %s226
        // Predicated region
        $region33: #{tpu_custom_call.1} parent=27 // pred_check
          %p228 = pneg %p118
        $region34: #{tpu_custom_call.1} parent=27 // pred_check_branch
          %230 = sbr.rel (%p228) target = $region36
        $region35: #{tpu_custom_call.1} parent=27 // pred_region
          %s232 = ssub.s32 64, 64
          %233 = vsyncadd %s224, %s232
          %s234 = sadd.s32 %s26, %s25
          %s235 = sadd.s32 %s234, %s24
          %s236 = smul.addr %s235, 64
          %s237 = scalar_lea.hbm %s2, %s236
          %s239 = sshll.u32 %s227, 4
          %s240 = int_to_ptr.vmem [resolvable:$true] %s239
          %242 = dma.vmem_to_hbm [thread:$0]  %s240, 64, %s237, %s224
        $region36: #{tpu_custom_call.1} parent=27 // pred_fallthru
          _
      $region28: #{tpu_custom_call.1} parent=5 // pred_fallthru
        _
      %p243 = scmp.le.s32.totalorder 2, %s14
      // Predicated region
      $region37: #{tpu_custom_call.1} parent=5 // pred_check
        %p244 = pneg %p243
      $region38: #{tpu_custom_call.1} parent=5 // pred_check_branch
        %246 = sbr.rel (%p244) target = $region40
      $region39: #{tpu_custom_call.1} parent=5 // pred_region
        %s247 = ssub.s32 %s14, 2
        // Predicated region
        $region41: #{tpu_custom_call.1} parent=39 // pred_check
          %p248 = pneg %p124
        $region42: #{tpu_custom_call.1} parent=39 // pred_check_branch
          %250 = sbr.rel (%p248) target = $region44
        $region43: #{tpu_custom_call.1} parent=39 // pred_region
          %s251 = sand.u32 %s109, 1
          %s252 = scalar_lea.sflag [#allocation4], %s251
          %s253 = sand.u32 %s109, 1
          %s254 = smul.addr %s253, 4
          %s255 = scalar_lea.vmem [#allocation5], %s254
          %256 = dma.done %s252, 64
        $region44: #{tpu_custom_call.1} parent=39 // pred_fallthru
          _
      $region40: #{tpu_custom_call.1} parent=5 // pred_fallthru
        _
    $region6: #{tpu_custom_call.1} parent=1 // loop_footer
      %s18 = sadd.s32 1, %s14
    $region7: #{tpu_custom_call.1} parent=1 // loop_footer_branch
      %13 = sbr.rel target = $region3
    $region8: #{tpu_custom_call.1} parent=1 // loop_exit
      _
    %257 = vsyncpa [#allocation3], 1
    %s258 = scalar_lea.sflag [#allocation3], 1
    %259 = vsyncpa %s258, 1
    %260 = vsyncpa [#allocation4], 1
    %s261 = scalar_lea.sflag [#allocation4], 1
    %262 = vsyncpa %s261, 1

</llo_original>
